<compile_context>
chip_gen: v7x
topology: tpu7x:2x2x1
jax: 0.10.0
libtpu: 0.0.40
codegen_flags: <defaults>
</compile_context>

<pallas_src>
import jax
import jax.numpy as jnp
import numpy as np
from jax.experimental import pallas as pl
from jax.experimental.pallas import tpu as pltpu

_LANE = 128                    # lane width
_SUBLANE_U8 = 32               # uint8 sublane packing granularity
_VMEM_DATA_BUDGET = 20 * 1024 * 1024   # double-buffered (u8 in + f32 out) data
_SINGLE_BLOCK_MAX_ROWS = 256   # below this, a single full-extent block is fine
_INV_255 = 1.0 / 255.0


def _cdiv(a, b):
    return (a + b - 1) // b


def _round_up(x, m):
    return _cdiv(x, m) * m


def _choose_tile_rows(C, H, W):
    """Rows per grid block.

    - multiple of 32 (uint8 sublane tiling) unless it's the full extent,
    - sized so double-buffered u8-in + f32-out tiles stay under budget,
    - even grid count for non-tiny images so both v7x TensorCores get work.
    """
    w_pad = _round_up(W, _LANE)
    bytes_per_row = 2 * C * w_pad * (1 + 4)          # 2 buffers x (u8 + f32)
    max_rows = max(_SUBLANE_U8,
                   (_VMEM_DATA_BUDGET // bytes_per_row)
                   // _SUBLANE_U8 * _SUBLANE_U8)
    if H <= _SINGLE_BLOCK_MAX_ROWS and H <= max_rows:
        return H                                      # one full-extent block
    n_tiles = max(2, _cdiv(H, max_rows))
    n_tiles += n_tiles % 2                            # even -> balanced on 2 TCs
    return min(max_rows, _round_up(_cdiv(H, n_tiles), _SUBLANE_U8))


def _to_tensor_kernel(img_ref, out_ref):
    # uint8 -> float32, scale by precomputed 1/255 (reciprocal multiply: one
    # VALU op, keeps the kernel DMA-bound).  clamp(0, 1) elided: result is
    # provably in [0, 1] (255 * f32(1/255) rounds to exactly 1.0).
    out_ref[...] = img_ref[...].astype(jnp.float32) * jnp.float32(_INV_255)


@jax.jit
def _dict_to_tensor_impl(image):
    H, W, C = image.shape
    # Single uint8 HWC -> CHW relayout pass (XLA); everything downstream of it
    # (cast, scale, final layout) happens inside the Pallas kernel with no
    # further glue copies.
    chw = jnp.transpose(image, (2, 0, 1))

    tile_rows = _choose_tile_rows(C, H, W)
    grid = (_cdiv(H, tile_rows),)

    return pl.pallas_call(
        _to_tensor_kernel,
        out_shape=jax.ShapeDtypeStruct((C, H, W), jnp.float32),
        grid=grid,
        in_specs=[pl.BlockSpec((C, tile_rows, W), lambda i: (0, i, 0))],
        out_specs=pl.BlockSpec((C, tile_rows, W), lambda i: (0, i, 0)),
        compiler_params=pltpu.CompilerParams(
            dimension_semantics=("parallel",),        # megacore sharding on v7x
            vmem_limit_bytes=32 * 1024 * 1024,        # data budget + headroom
        ),
    )(chw)


def dict_to_tensor(sample):
    """JAX/Pallas equivalent of DictToTensor.forward(sample)."""
    image = sample["image"]                 # (H, W, C) uint8
    assert image.dtype == jnp.uint8, "only the uint8 path of F.to_tensor is modeled"
    return _dict_to_tensor_impl(image)


if __name__ == "__main__":
    key = jax.random.PRNGKey(0)

    def run_and_check(h, w, c, k):
        image = jax.random.randint(k, (h, w, c), minval=0, maxval=256,
                                   dtype=jnp.int32).astype(jnp.uint8)
        out = jax.block_until_ready(dict_to_tensor({"image": image}))
        ref = np.clip(
            np.transpose(np.asarray(image), (2, 0, 1)).astype(np.float32) / 255.0,
            0.0, 1.0)
        np.testing.assert_allclose(np.asarray(out), ref, rtol=1e-6, atol=1e-6)
        assert out.shape == (c, h, w) and out.dtype == jnp.float32

    k1, k2, k3 = jax.random.split(key, 3)
    run_and_check(16, 16, 3, k1)      # tiny: single full-extent block path
    run_and_check(300, 300, 3, k2)    # > 256 rows: even 2-tile grid, partial last block
    run_and_check(518, 37, 3, k3)     # depth_anything-like H, ragged W / rows
    print("KERNEL_OK")
</pallas_src>

<mosaic_0001>
module attributes {stable_mosaic.version = 11 : i64} {
  func.func @_to_tensor_kernel(%arg0: i32, %arg1: memref<3x16x16xi8, #tpu.memory_space<vmem>>, %arg2: memref<3x16x16xf32, #tpu.memory_space<vmem>>) attributes {dimension_semantics = [#tpu.dimension_semantics<parallel>], iteration_bounds = array<i64: 1>, scalar_prefetch = 0 : i64, scratch_operands = 0 : i64, tpu.core_type = #tpu.core_type<tc>, window_params = [{transform_indices = @transform_0, window_bounds = array<i64: 3, 16, 16>}, {transform_indices = @transform_1, window_bounds = array<i64: 3, 16, 16>}]} {
    %c0 = arith.constant 0 : index
    %c0_0 = arith.constant 0 : index
    %c0_1 = arith.constant 0 : index
    %0 = vector.load %arg1[%c0, %c0_0, %c0_1] : memref<3x16x16xi8, #tpu.memory_space<vmem>>, vector<3x16x16xi8>
    %1 = arith.uitofp %0 : vector<3x16x16xi8> to vector<3x16x16xf32>
    %cst = arith.constant 0.00392156886 : f32
    %2 = vector.broadcast %cst : f32 to vector<3x16x16xf32>
    %3 = arith.mulf %1, %2 : vector<3x16x16xf32>
    %c0_2 = arith.constant 0 : index
    %c0_3 = arith.constant 0 : index
    %c0_4 = arith.constant 0 : index
    %4 = vector.load %arg2[%c0_2, %c0_3, %c0_4] : memref<3x16x16xf32, #tpu.memory_space<vmem>>, vector<3x16x16xf32>
    tpu.vector_store %arg2[%c0_2, %c0_3, %c0_4], %3 {strides = array<i32>} : memref<3x16x16xf32, #tpu.memory_space<vmem>>, vector<3x16x16xf32>,
    return
  }
  func.func @transform_0(%arg0: i32) -> (i32, i32, i32) {
    %c0_i32 = arith.constant 0 : i32
    %c0_i32_0 = arith.constant 0 : i32
    %c0_i32_1 = arith.constant 0 : i32
    return %c0_i32, %arg0, %c0_i32_0 : i32, i32, i32
  }
  func.func @transform_1(%arg0: i32) -> (i32, i32, i32) {
    %c0_i32 = arith.constant 0 : i32
    %c0_i32_0 = arith.constant 0 : i32
    %c0_i32_1 = arith.constant 0 : i32
    return %c0_i32, %arg0, %c0_i32_0 : i32, i32, i32
  }
}

</mosaic_0001>

<llo_original>
// kernel: _dict_to_tensor_impl.1
$region0: #{_dict_to_tensor_impl.1}
  #allocation0 [shape = 'u32[]', space=smem, size = 0x4, offset = 0x4, fixed_abs, tag = 'smem constant byte address 0x4 - core index']
  #allocation1 [shape = 'u32[144,128]{1,0:T(1,128)}', space=vmem, size = 0x12000, scoped, tag = 'internal scratch']
  %s0 = inlined_call_operand.hbm [shape: u8[3,16,16], index: 0, kind: input, shape index: {}]
  %s1 = inlined_call_operand.hbm [shape: f32[3,16,16], index: 1, kind: output, shape index: {}]
  %s2 = sld [smem:[#allocation0]]
  $region18: #{_dict_to_tensor_impl.1} parent=0
    _
  %s4 = ssub.s32 1, %s2
  %s5 = scalar_select 0, %s4, %s2
  $region1: #{_dict_to_tensor_impl.1} parent=0
    #allocation2 [shape = 'u8[6144]{0}', space=vmem, size = 0x1800, scoped, tag = 'input window, operand 0, single buffered']
    #allocation3 [shape = 's32[1]{0}', space=sflag, size = 0x4, scoped, tag = 'scoped memory for _dict_to_tensor_impl.1']
    #allocation4 [shape = 's32[1]{0}', space=sflag, size = 0x4, scoped, tag = 'scoped memory for _dict_to_tensor_impl.1']
    #allocation5 [shape = 'u8[24576]{0}', space=vmem, size = 0x6000, scoped, tag = 'output window, operand 0, single buffered']
    %6 = vsyncpa [#allocation3], 0
    %7 = vsyncpa [#allocation4], 0
    // Predicated region
    $region2: #{_dict_to_tensor_impl.1} parent=1 // pred_check
      _
    $region3: #{_dict_to_tensor_impl.1} parent=1 // pred_check_branch
      %9 = sbr.rel (0) target = $region5
    $region4: #{_dict_to_tensor_impl.1} parent=1 // pred_region
      %s11 = ssub.s32 192, 192
      %12 = vsyncadd [#allocation3], %s11
      %s13 = sshll.u32 [#allocation2], 4
      %s14 = int_to_ptr.vmem [resolvable:$true] %s13
      %19 = dma.hbm_to_vmem [thread:$0]  %s0, 192, %s14, [#allocation3], 32, 32, 2
    $region5: #{_dict_to_tensor_impl.1} parent=1 // pred_fallthru
      _
    // Predicated region
    $region6: #{_dict_to_tensor_impl.1} parent=1 // pred_check
      _
    $region7: #{_dict_to_tensor_impl.1} parent=1 // pred_check_branch
      %21 = sbr.rel (0) target = $region9
    $region8: #{_dict_to_tensor_impl.1} parent=1 // pred_region
      %22 = dma.done [#allocation3], 192
    $region9: #{_dict_to_tensor_impl.1} parent=1 // pred_fallthru
      _
    %v23 = vld [vmem:[#allocation2] sm:$0x3]
    %v24 = vld [vmem:[#allocation2 + $0x2] sm:$0x3]
    %v25 = vld [vmem:[#allocation2 + $0x4] sm:$0x3]
    %v26 = vld [vmem:[#allocation2 + $0x6] sm:$0x3]
    %v27 = vld [vmem:[#allocation2 + $0x8] sm:$0x3]
    %v28 = vld [vmem:[#allocation2 + $0xa] sm:$0x3]
    %v29 = vunpack.c.0.s8 %v23
    %v30 = vunpack.c.0.s8 %v24
    %v31 = vunpack.c.0.s8 %v25
    %v32 = vunpack.c.0.s8 %v26
    %v33 = vunpack.c.0.s8 %v27
    %v34 = vunpack.c.0.s8 %v28
    %v35 = vand.u32 %v29, 255
    %v36 = vand.u32 %v30, 255
    %v37 = vand.u32 %v31, 255
    %v38 = vand.u32 %v32, 255
    %v39 = vand.u32 %v33, 255
    %v40 = vand.u32 %v34, 255
    %v41 = vcvt.s32.f32 %v35
    %v42 = vcvt.s32.f32 %v36
    %v43 = vcvt.s32.f32 %v37
    %v44 = vcvt.s32.f32 %v38
    %v45 = vcvt.s32.f32 %v39
    %v46 = vcvt.s32.f32 %v40
    %v47 = vmul.f32 %v41, 0.003921569
    %v48 = vmul.f32 %v42, 0.003921569
    %v49 = vmul.f32 %v43, 0.003921569
    %v50 = vmul.f32 %v44, 0.003921569
    %v51 = vmul.f32 %v45, 0.003921569
    %v52 = vmul.f32 %v46, 0.003921569
    %vm53 = vcmask 130048
    %54 = vst.msk [vmem:[#allocation5] sm:$0xff] %vm53, %v47
    %55 = vst.msk [vmem:[#allocation5 + $0x8] sm:$0xff] %vm53, %v48
    %56 = vst.msk [vmem:[#allocation5 + $0x10] sm:$0xff] %vm53, %v49
    %57 = vst.msk [vmem:[#allocation5 + $0x18] sm:$0xff] %vm53, %v50
    %58 = vst.msk [vmem:[#allocation5 + $0x20] sm:$0xff] %vm53, %v51
    %59 = vst.msk [vmem:[#allocation5 + $0x28] sm:$0xff] %vm53, %v52
    // Predicated region
    $region10: #{_dict_to_tensor_impl.1} parent=1 // pred_check
      _
    $region11: #{_dict_to_tensor_impl.1} parent=1 // pred_check_branch
      %61 = sbr.rel (0) target = $region13
    $region12: #{_dict_to_tensor_impl.1} parent=1 // pred_region
      %s63 = ssub.s32 768, 768
      %64 = vsyncadd [#allocation4], %s63
      %s65 = sshll.u32 [#allocation5], 4
      %s66 = int_to_ptr.vmem [resolvable:$true] %s65
      %71 = dma.vmem_to_hbm [thread:$0]  %s66, 768, %s1, [#allocation4], 128, 128, 8
    $region13: #{_dict_to_tensor_impl.1} parent=1 // pred_fallthru
      _
    // Predicated region
    $region14: #{_dict_to_tensor_impl.1} parent=1 // pred_check
      _
    $region15: #{_dict_to_tensor_impl.1} parent=1 // pred_check_branch
      %73 = sbr.rel (0) target = $region17
    $region16: #{_dict_to_tensor_impl.1} parent=1 // pred_region
      %74 = dma.done [#allocation4], 768
    $region17: #{_dict_to_tensor_impl.1} parent=1 // pred_fallthru
      _
    %75 = vsyncpa [#allocation3], 1
    %76 = vsyncpa [#allocation4], 1

</llo_original>
